<compile_context>
chip_gen: v7x
topology: tpu7x:2x2x1
jax: 0.10.0
libtpu: 0.0.40
codegen_flags: <defaults>
</compile_context>

<pallas_src>
import functools

import jax
import jax.numpy as jnp
from jax import lax
from jax.experimental import pallas as pl
from jax.experimental.pallas import tpu as pltpu


def _round_up(n, m):
    return ((n + m - 1) // m) * m


def _binarynet_kernel(x_ref, p_ref, o_ref, *, F, H, CR):
    # x_ref: (F, TR, 128) VMEM  -- per-feature batch planes (batch dense on
    #                              sublanes AND lanes)
    # p_ref: (F*H + 2*H + 1,) SMEM -- packed [w1 (H,F) row-major | b1 | w2 | b2]
    # o_ref: (TR, 128) VMEM     -- sigmoid output, same dense batch layout
    TR = o_ref.shape[0]
    n_chunks = TR // CR
    off_b1 = H * F
    off_w2 = H * F + H
    off_b2 = H * F + 2 * H

    def chunk_body(c, carry):
        r0 = pl.multiple_of(c * CR, CR)
        # Load the chunk of each feature plane once; reuse across all H units.
        xs = [x_ref[f, pl.ds(r0, CR), :] for f in range(F)]      # F x (CR, 128)

        z = jnp.zeros((CR, 128), jnp.float32)
        for j in range(H):                                       # static H=16
            hj = xs[0] * p_ref[j * F]                            # scalar * vector
            for f in range(1, F):
                hj = hj + xs[f] * p_ref[j * F + f]
            hj = jnp.maximum(hj + p_ref[off_b1 + j], 0.0)        # + b1[j], ReLU
            z = z + hj * p_ref[off_w2 + j]                       # + w2[j] * relu(h_j)
        z = z + p_ref[off_b2]                                    # + b2

        # Exact sigmoid (exp on the EUP, exact divide): fixes the tolerance failure.
        o_ref[pl.ds(r0, CR), :] = 1.0 / (1.0 + jnp.exp(-z))
        return carry

    lax.fori_loop(0, n_chunks, chunk_body, 0)


def binarynet_forward(x, w1, b1, w2, b2, *, tile_rows=1024, chunk_rows=64):
    """BinaryNet forward: sigmoid(relu(x @ w1.T + b1) @ w2.T + b2).

    x : (B, num_features) float32
    w1: (16, num_features)  -- PyTorch layer_1.weight layout
    b1: (16,)               -- layer_1.bias
    w2: (1, 16)             -- layer_out.weight
    b2: (1,)                -- layer_out.bias
    returns (B, 1) float32
    """
    B, F = x.shape
    H = w1.shape[0]

    # ---- batch layout: dense over sublanes AND lanes -----------------------
    NR = pl.cdiv(B, 128)                     # number of 128-lane batch rows
    if NR <= chunk_rows:
        TR = CR = NR                         # tiny batch: one tile, one chunk
    else:
        CR = chunk_rows
        TR = min(_round_up(tile_rows, 2 * CR), _round_up(NR, 2 * CR))
        # v7x megacore: if the whole batch fits one tile, halve it so the
        # "parallel" grid axis gives both TensorCores work.
        if _round_up(NR, TR) == TR and TR >= 2 * CR:
            TR //= 2
    NRp = _round_up(NR, TR)
    Bp = NRp * 128

    # Single relayout pass: (B, F) -> zero-padded (F, NRp, 128) feature planes.
    # TODO(synk): ideally the upstream producer would emit this plane layout directly.
    xp = jnp.pad(x.astype(jnp.float32), ((0, Bp - B), (0, 0)))
    x_planes = xp.T.reshape(F, NRp, 128)

    # All weights/biases packed into one tiny SMEM-resident scalar table.
    params = jnp.concatenate([
        w1.astype(jnp.float32).reshape(-1),   # H*F, row-major -> index j*F + f
        b1.astype(jnp.float32).reshape(-1),   # H
        w2.astype(jnp.float32).reshape(-1),   # H
        b2.astype(jnp.float32).reshape(-1),   # 1
    ])

    grid = (NRp // TR,)
    kernel = functools.partial(_binarynet_kernel, F=F, H=H, CR=CR)

    cost = pl.CostEstimate(
        flops=2 * B * H * (F + 1),
        transcendentals=B,
        bytes_accessed=(F + 1) * Bp * 4 + int(params.size) * 4,
    )

    out = pl.pallas_call(
        kernel,
        out_shape=jax.ShapeDtypeStruct((NRp, 128), jnp.float32),
        grid=grid,
        in_specs=[
            pl.BlockSpec((F, TR, 128), lambda i: (0, i, 0)),      # activation planes
            pl.BlockSpec(memory_space=pltpu.MemorySpace.SMEM),    # scalar params
        ],
        out_specs=pl.BlockSpec((TR, 128), lambda i: (i, 0)),      # fully dense output
        compiler_params=pltpu.CompilerParams(
            dimension_semantics=("parallel",),                    # shard batch over TCs
            vmem_limit_bytes=32 * 1024 * 1024,
        ),
        cost_estimate=cost,
    )(x_planes, params)

    # Drop padding and return the caller-facing (B, 1) layout.
    return out.reshape(Bp)[:B].reshape(B, 1)


def init_params(key, num_features=2, hidden=16):
    # PyTorch nn.Linear layouts + uniform(-1/sqrt(fan_in), 1/sqrt(fan_in)) init.
    k1, k2, k3, k4 = jax.random.split(key, 4)
    bound1 = 1.0 / jnp.sqrt(jnp.float32(num_features))
    bound2 = 1.0 / jnp.sqrt(jnp.float32(hidden))
    w1 = jax.random.uniform(k1, (hidden, num_features), jnp.float32, -bound1, bound1)
    b1 = jax.random.uniform(k2, (hidden,), jnp.float32, -bound1, bound1)
    w2 = jax.random.uniform(k3, (1, hidden), jnp.float32, -bound2, bound2)
    b2 = jax.random.uniform(k4, (1,), jnp.float32, -bound2, bound2)
    return w1, b1, w2, b2


if __name__ == "__main__":
    key = jax.random.PRNGKey(0)
    kx, kp = jax.random.split(key)

    batch = 8
    num_features = 2
    x = jax.random.normal(kx, (batch, num_features), dtype=jnp.float32)
    w1, b1, w2, b2 = init_params(kp, num_features=num_features, hidden=16)

    out = binarynet_forward(x, w1, b1, w2, b2)
    out = jax.block_until_ready(out)

    # Plain-JAX reference of the same forward pass (PyTorch layouts).
    ref = jax.nn.sigmoid(jnp.maximum(x @ w1.T + b1, 0.0) @ w2.T + b2)
    assert out.shape == (batch, 1)
    assert jnp.allclose(out, ref, atol=1e-5, rtol=1e-5), float(
        jnp.max(jnp.abs(out - ref)))

    print("KERNEL_OK")
</pallas_src>

<mosaic_0001>
module attributes {stable_mosaic.version = 11 : i64} {
  func.func @_binarynet_kernel(%arg0: i32, %arg1: memref<2x1x128xf32, #tpu.memory_space<vmem>>, %arg2: memref<65xf32, #tpu.memory_space<smem>>, %arg3: memref<1x128xf32, #tpu.memory_space<vmem>>) attributes {dimension_semantics = [#tpu.dimension_semantics<parallel>], iteration_bounds = array<i64: 1>, scalar_prefetch = 0 : i64, scratch_operands = 0 : i64, tpu.core_type = #tpu.core_type<tc>, window_params = [{transform_indices = @transform_0, window_bounds = array<i64: 2, 1, 128>}, {transform_indices = @transform_1, window_bounds = array<i64: 65>}, {transform_indices = @transform_2, window_bounds = array<i64: 1, 128>}]} {
    %c0_i32 = arith.constant 0 : i32
    %c1_i32 = arith.constant 1 : i32
    %0 = arith.muli %c0_i32, %c1_i32 : i32
    %1 = tpu.assume_multiple %0, 1 : i32
    %c0 = arith.constant 0 : index
    %2 = arith.index_cast %1 : i32 to index
    %c0_0 = arith.constant 0 : index
    %3 = vector.load %arg1[%c0, %2, %c0_0] : memref<2x1x128xf32, #tpu.memory_space<vmem>>, vector<1x1x128xf32>
    %4 = vector.shape_cast %3 : vector<1x1x128xf32> to vector<1x128xf32>
    %c1 = arith.constant 1 : index
    %5 = arith.index_cast %1 : i32 to index
    %c0_1 = arith.constant 0 : index
    %6 = vector.load %arg1[%c1, %5, %c0_1] : memref<2x1x128xf32, #tpu.memory_space<vmem>>, vector<1x1x128xf32>
    %7 = vector.shape_cast %6 : vector<1x1x128xf32> to vector<1x128xf32>
    %cst = arith.constant 0.000000e+00 : f32
    %8 = vector.broadcast %cst : f32 to vector<1x128xf32>
    %c0_2 = arith.constant 0 : index
    %9 = memref.load %arg2[%c0_2] : memref<65xf32, #tpu.memory_space<smem>>
    %10 = vector.broadcast %9 : f32 to vector<1x128xf32>
    %11 = arith.mulf %4, %10 : vector<1x128xf32>
    %c1_3 = arith.constant 1 : index
    %12 = memref.load %arg2[%c1_3] : memref<65xf32, #tpu.memory_space<smem>>
    %13 = vector.broadcast %12 : f32 to vector<1x128xf32>
    %14 = arith.mulf %7, %13 : vector<1x128xf32>
    %15 = arith.addf %11, %14 : vector<1x128xf32>
    %c32 = arith.constant 32 : index
    %16 = memref.load %arg2[%c32] : memref<65xf32, #tpu.memory_space<smem>>
    %17 = vector.broadcast %16 : f32 to vector<1x128xf32>
    %18 = arith.addf %15, %17 : vector<1x128xf32>
    %cst_4 = arith.constant 0.000000e+00 : f32
    %19 = vector.broadcast %cst_4 : f32 to vector<1x128xf32>
    %20 = arith.maximumf %18, %19 : vector<1x128xf32>
    %c48 = arith.constant 48 : index
    %21 = memref.load %arg2[%c48] : memref<65xf32, #tpu.memory_space<smem>>
    %22 = vector.broadcast %21 : f32 to vector<1x128xf32>
    %23 = arith.mulf %20, %22 : vector<1x128xf32>
    %24 = arith.addf %8, %23 : vector<1x128xf32>
    %c2 = arith.constant 2 : index
    %25 = memref.load %arg2[%c2] : memref<65xf32, #tpu.memory_space<smem>>
    %26 = vector.broadcast %25 : f32 to vector<1x128xf32>
    %27 = arith.mulf %4, %26 : vector<1x128xf32>
    %c3 = arith.constant 3 : index
    %28 = memref.load %arg2[%c3] : memref<65xf32, #tpu.memory_space<smem>>
    %29 = vector.broadcast %28 : f32 to vector<1x128xf32>
    %30 = arith.mulf %7, %29 : vector<1x128xf32>
    %31 = arith.addf %27, %30 : vector<1x128xf32>
    %c33 = arith.constant 33 : index
    %32 = memref.load %arg2[%c33] : memref<65xf32, #tpu.memory_space<smem>>
    %33 = vector.broadcast %32 : f32 to vector<1x128xf32>
    %34 = arith.addf %31, %33 : vector<1x128xf32>
    %cst_5 = arith.constant 0.000000e+00 : f32
    %35 = vector.broadcast %cst_5 : f32 to vector<1x128xf32>
    %36 = arith.maximumf %34, %35 : vector<1x128xf32>
    %c49 = arith.constant 49 : index
    %37 = memref.load %arg2[%c49] : memref<65xf32, #tpu.memory_space<smem>>
    %38 = vector.broadcast %37 : f32 to vector<1x128xf32>
    %39 = arith.mulf %36, %38 : vector<1x128xf32>
    %40 = arith.addf %24, %39 : vector<1x128xf32>
    %c4 = arith.constant 4 : index
    %41 = memref.load %arg2[%c4] : memref<65xf32, #tpu.memory_space<smem>>
    %42 = vector.broadcast %41 : f32 to vector<1x128xf32>
    %43 = arith.mulf %4, %42 : vector<1x128xf32>
    %c5 = arith.constant 5 : index
    %44 = memref.load %arg2[%c5] : memref<65xf32, #tpu.memory_space<smem>>
    %45 = vector.broadcast %44 : f32 to vector<1x128xf32>
    %46 = arith.mulf %7, %45 : vector<1x128xf32>
    %47 = arith.addf %43, %46 : vector<1x128xf32>
    %c34 = arith.constant 34 : index
    %48 = memref.load %arg2[%c34] : memref<65xf32, #tpu.memory_space<smem>>
    %49 = vector.broadcast %48 : f32 to vector<1x128xf32>
    %50 = arith.addf %47, %49 : vector<1x128xf32>
    %cst_6 = arith.constant 0.000000e+00 : f32
    %51 = vector.broadcast %cst_6 : f32 to vector<1x128xf32>
    %52 = arith.maximumf %50, %51 : vector<1x128xf32>
    %c50 = arith.constant 50 : index
    %53 = memref.load %arg2[%c50] : memref<65xf32, #tpu.memory_space<smem>>
    %54 = vector.broadcast %53 : f32 to vector<1x128xf32>
    %55 = arith.mulf %52, %54 : vector<1x128xf32>
    %56 = arith.addf %40, %55 : vector<1x128xf32>
    %c6 = arith.constant 6 : index
    %57 = memref.load %arg2[%c6] : memref<65xf32, #tpu.memory_space<smem>>
    %58 = vector.broadcast %57 : f32 to vector<1x128xf32>
    %59 = arith.mulf %4, %58 : vector<1x128xf32>
    %c7 = arith.constant 7 : index
    %60 = memref.load %arg2[%c7] : memref<65xf32, #tpu.memory_space<smem>>
    %61 = vector.broadcast %60 : f32 to vector<1x128xf32>
    %62 = arith.mulf %7, %61 : vector<1x128xf32>
    %63 = arith.addf %59, %62 : vector<1x128xf32>
    %c35 = arith.constant 35 : index
    %64 = memref.load %arg2[%c35] : memref<65xf32, #tpu.memory_space<smem>>
    %65 = vector.broadcast %64 : f32 to vector<1x128xf32>
    %66 = arith.addf %63, %65 : vector<1x128xf32>
    %cst_7 = arith.constant 0.000000e+00 : f32
    %67 = vector.broadcast %cst_7 : f32 to vector<1x128xf32>
    %68 = arith.maximumf %66, %67 : vector<1x128xf32>
    %c51 = arith.constant 51 : index
    %69 = memref.load %arg2[%c51] : memref<65xf32, #tpu.memory_space<smem>>
    %70 = vector.broadcast %69 : f32 to vector<1x128xf32>
    %71 = arith.mulf %68, %70 : vector<1x128xf32>
    %72 = arith.addf %56, %71 : vector<1x128xf32>
    %c8 = arith.constant 8 : index
    %73 = memref.load %arg2[%c8] : memref<65xf32, #tpu.memory_space<smem>>
    %74 = vector.broadcast %73 : f32 to vector<1x128xf32>
    %75 = arith.mulf %4, %74 : vector<1x128xf32>
    %c9 = arith.constant 9 : index
    %76 = memref.load %arg2[%c9] : memref<65xf32, #tpu.memory_space<smem>>
    %77 = vector.broadcast %76 : f32 to vector<1x128xf32>
    %78 = arith.mulf %7, %77 : vector<1x128xf32>
    %79 = arith.addf %75, %78 : vector<1x128xf32>
    %c36 = arith.constant 36 : index
    %80 = memref.load %arg2[%c36] : memref<65xf32, #tpu.memory_space<smem>>
    %81 = vector.broadcast %80 : f32 to vector<1x128xf32>
    %82 = arith.addf %79, %81 : vector<1x128xf32>
    %cst_8 = arith.constant 0.000000e+00 : f32
    %83 = vector.broadcast %cst_8 : f32 to vector<1x128xf32>
    %84 = arith.maximumf %82, %83 : vector<1x128xf32>
    %c52 = arith.constant 52 : index
    %85 = memref.load %arg2[%c52] : memref<65xf32, #tpu.memory_space<smem>>
    %86 = vector.broadcast %85 : f32 to vector<1x128xf32>
    %87 = arith.mulf %84, %86 : vector<1x128xf32>
    %88 = arith.addf %72, %87 : vector<1x128xf32>
    %c10 = arith.constant 10 : index
    %89 = memref.load %arg2[%c10] : memref<65xf32, #tpu.memory_space<smem>>
    %90 = vector.broadcast %89 : f32 to vector<1x128xf32>
    %91 = arith.mulf %4, %90 : vector<1x128xf32>
    %c11 = arith.constant 11 : index
    %92 = memref.load %arg2[%c11] : memref<65xf32, #tpu.memory_space<smem>>
    %93 = vector.broadcast %92 : f32 to vector<1x128xf32>
    %94 = arith.mulf %7, %93 : vector<1x128xf32>
    %95 = arith.addf %91, %94 : vector<1x128xf32>
    %c37 = arith.constant 37 : index
    %96 = memref.load %arg2[%c37] : memref<65xf32, #tpu.memory_space<smem>>
    %97 = vector.broadcast %96 : f32 to vector<1x128xf32>
    %98 = arith.addf %95, %97 : vector<1x128xf32>
    %cst_9 = arith.constant 0.000000e+00 : f32
    %99 = vector.broadcast %cst_9 : f32 to vector<1x128xf32>
    %100 = arith.maximumf %98, %99 : vector<1x128xf32>
    %c53 = arith.constant 53 : index
    %101 = memref.load %arg2[%c53] : memref<65xf32, #tpu.memory_space<smem>>
    %102 = vector.broadcast %101 : f32 to vector<1x128xf32>
    %103 = arith.mulf %100, %102 : vector<1x128xf32>
    %104 = arith.addf %88, %103 : vector<1x128xf32>
    %c12 = arith.constant 12 : index
    %105 = memref.load %arg2[%c12] : memref<65xf32, #tpu.memory_space<smem>>
    %106 = vector.broadcast %105 : f32 to vector<1x128xf32>
    %107 = arith.mulf %4, %106 : vector<1x128xf32>
    %c13 = arith.constant 13 : index
    %108 = memref.load %arg2[%c13] : memref<65xf32, #tpu.memory_space<smem>>
    %109 = vector.broadcast %108 : f32 to vector<1x128xf32>
    %110 = arith.mulf %7, %109 : vector<1x128xf32>
    %111 = arith.addf %107, %110 : vector<1x128xf32>
    %c38 = arith.constant 38 : index
    %112 = memref.load %arg2[%c38] : memref<65xf32, #tpu.memory_space<smem>>
    %113 = vector.broadcast %112 : f32 to vector<1x128xf32>
    %114 = arith.addf %111, %113 : vector<1x128xf32>
    %cst_10 = arith.constant 0.000000e+00 : f32
    %115 = vector.broadcast %cst_10 : f32 to vector<1x128xf32>
    %116 = arith.maximumf %114, %115 : vector<1x128xf32>
    %c54 = arith.constant 54 : index
    %117 = memref.load %arg2[%c54] : memref<65xf32, #tpu.memory_space<smem>>
    %118 = vector.broadcast %117 : f32 to vector<1x128xf32>
    %119 = arith.mulf %116, %118 : vector<1x128xf32>
    %120 = arith.addf %104, %119 : vector<1x128xf32>
    %c14 = arith.constant 14 : index
    %121 = memref.load %arg2[%c14] : memref<65xf32, #tpu.memory_space<smem>>
    %122 = vector.broadcast %121 : f32 to vector<1x128xf32>
    %123 = arith.mulf %4, %122 : vector<1x128xf32>
    %c15 = arith.constant 15 : index
    %124 = memref.load %arg2[%c15] : memref<65xf32, #tpu.memory_space<smem>>
    %125 = vector.broadcast %124 : f32 to vector<1x128xf32>
    %126 = arith.mulf %7, %125 : vector<1x128xf32>
    %127 = arith.addf %123, %126 : vector<1x128xf32>
    %c39 = arith.constant 39 : index
    %128 = memref.load %arg2[%c39] : memref<65xf32, #tpu.memory_space<smem>>
    %129 = vector.broadcast %128 : f32 to vector<1x128xf32>
    %130 = arith.addf %127, %129 : vector<1x128xf32>
    %cst_11 = arith.constant 0.000000e+00 : f32
    %131 = vector.broadcast %cst_11 : f32 to vector<1x128xf32>
    %132 = arith.maximumf %130, %131 : vector<1x128xf32>
    %c55 = arith.constant 55 : index
    %133 = memref.load %arg2[%c55] : memref<65xf32, #tpu.memory_space<smem>>
    %134 = vector.broadcast %133 : f32 to vector<1x128xf32>
    %135 = arith.mulf %132, %134 : vector<1x128xf32>
    %136 = arith.addf %120, %135 : vector<1x128xf32>
    %c16 = arith.constant 16 : index
    %137 = memref.load %arg2[%c16] : memref<65xf32, #tpu.memory_space<smem>>
    %138 = vector.broadcast %137 : f32 to vector<1x128xf32>
    %139 = arith.mulf %4, %138 : vector<1x128xf32>
    %c17 = arith.constant 17 : index
    %140 = memref.load %arg2[%c17] : memref<65xf32, #tpu.memory_space<smem>>
    %141 = vector.broadcast %140 : f32 to vector<1x128xf32>
    %142 = arith.mulf %7, %141 : vector<1x128xf32>
    %143 = arith.addf %139, %142 : vector<1x128xf32>
    %c40 = arith.constant 40 : index
    %144 = memref.load %arg2[%c40] : memref<65xf32, #tpu.memory_space<smem>>
    %145 = vector.broadcast %144 : f32 to vector<1x128xf32>
    %146 = arith.addf %143, %145 : vector<1x128xf32>
    %cst_12 = arith.constant 0.000000e+00 : f32
    %147 = vector.broadcast %cst_12 : f32 to vector<1x128xf32>
    %148 = arith.maximumf %146, %147 : vector<1x128xf32>
    %c56 = arith.constant 56 : index
    %149 = memref.load %arg2[%c56] : memref<65xf32, #tpu.memory_space<smem>>
    %150 = vector.broadcast %149 : f32 to vector<1x128xf32>
    %151 = arith.mulf %148, %150 : vector<1x128xf32>
    %152 = arith.addf %136, %151 : vector<1x128xf32>
    %c18 = arith.constant 18 : index
    %153 = memref.load %arg2[%c18] : memref<65xf32, #tpu.memory_space<smem>>
    %154 = vector.broadcast %153 : f32 to vector<1x128xf32>
    %155 = arith.mulf %4, %154 : vector<1x128xf32>
    %c19 = arith.constant 19 : index
    %156 = memref.load %arg2[%c19] : memref<65xf32, #tpu.memory_space<smem>>
    %157 = vector.broadcast %156 : f32 to vector<1x128xf32>
    %158 = arith.mulf %7, %157 : vector<1x128xf32>
    %159 = arith.addf %155, %158 : vector<1x128xf32>
    %c41 = arith.constant 41 : index
    %160 = memref.load %arg2[%c41] : memref<65xf32, #tpu.memory_space<smem>>
    %161 = vector.broadcast %160 : f32 to vector<1x128xf32>
    %162 = arith.addf %159, %161 : vector<1x128xf32>
    %cst_13 = arith.constant 0.000000e+00 : f32
    %163 = vector.broadcast %cst_13 : f32 to vector<1x128xf32>
    %164 = arith.maximumf %162, %163 : vector<1x128xf32>
    %c57 = arith.constant 57 : index
    %165 = memref.load %arg2[%c57] : memref<65xf32, #tpu.memory_space<smem>>
    %166 = vector.broadcast %165 : f32 to vector<1x128xf32>
    %167 = arith.mulf %164, %166 : vector<1x128xf32>
    %168 = arith.addf %152, %167 : vector<1x128xf32>
    %c20 = arith.constant 20 : index
    %169 = memref.load %arg2[%c20] : memref<65xf32, #tpu.memory_space<smem>>
    %170 = vector.broadcast %169 : f32 to vector<1x128xf32>
    %171 = arith.mulf %4, %170 : vector<1x128xf32>
    %c21 = arith.constant 21 : index
    %172 = memref.load %arg2[%c21] : memref<65xf32, #tpu.memory_space<smem>>
    %173 = vector.broadcast %172 : f32 to vector<1x128xf32>
    %174 = arith.mulf %7, %173 : vector<1x128xf32>
    %175 = arith.addf %171, %174 : vector<1x128xf32>
    %c42 = arith.constant 42 : index
    %176 = memref.load %arg2[%c42] : memref<65xf32, #tpu.memory_space<smem>>
    %177 = vector.broadcast %176 : f32 to vector<1x128xf32>
    %178 = arith.addf %175, %177 : vector<1x128xf32>
    %cst_14 = arith.constant 0.000000e+00 : f32
    %179 = vector.broadcast %cst_14 : f32 to vector<1x128xf32>
    %180 = arith.maximumf %178, %179 : vector<1x128xf32>
    %c58 = arith.constant 58 : index
    %181 = memref.load %arg2[%c58] : memref<65xf32, #tpu.memory_space<smem>>
    %182 = vector.broadcast %181 : f32 to vector<1x128xf32>
    %183 = arith.mulf %180, %182 : vector<1x128xf32>
    %184 = arith.addf %168, %183 : vector<1x128xf32>
    %c22 = arith.constant 22 : index
    %185 = memref.load %arg2[%c22] : memref<65xf32, #tpu.memory_space<smem>>
    %186 = vector.broadcast %185 : f32 to vector<1x128xf32>
    %187 = arith.mulf %4, %186 : vector<1x128xf32>
    %c23 = arith.constant 23 : index
    %188 = memref.load %arg2[%c23] : memref<65xf32, #tpu.memory_space<smem>>
    %189 = vector.broadcast %188 : f32 to vector<1x128xf32>
    %190 = arith.mulf %7, %189 : vector<1x128xf32>
    %191 = arith.addf %187, %190 : vector<1x128xf32>
    %c43 = arith.constant 43 : index
    %192 = memref.load %arg2[%c43] : memref<65xf32, #tpu.memory_space<smem>>
    %193 = vector.broadcast %192 : f32 to vector<1x128xf32>
    %194 = arith.addf %191, %193 : vector<1x128xf32>
    %cst_15 = arith.constant 0.000000e+00 : f32
    %195 = vector.broadcast %cst_15 : f32 to vector<1x128xf32>
    %196 = arith.maximumf %194, %195 : vector<1x128xf32>
    %c59 = arith.constant 59 : index
    %197 = memref.load %arg2[%c59] : memref<65xf32, #tpu.memory_space<smem>>
    %198 = vector.broadcast %197 : f32 to vector<1x128xf32>
    %199 = arith.mulf %196, %198 : vector<1x128xf32>
    %200 = arith.addf %184, %199 : vector<1x128xf32>
    %c24 = arith.constant 24 : index
    %201 = memref.load %arg2[%c24] : memref<65xf32, #tpu.memory_space<smem>>
    %202 = vector.broadcast %201 : f32 to vector<1x128xf32>
    %203 = arith.mulf %4, %202 : vector<1x128xf32>
    %c25 = arith.constant 25 : index
    %204 = memref.load %arg2[%c25] : memref<65xf32, #tpu.memory_space<smem>>
    %205 = vector.broadcast %204 : f32 to vector<1x128xf32>
    %206 = arith.mulf %7, %205 : vector<1x128xf32>
    %207 = arith.addf %203, %206 : vector<1x128xf32>
    %c44 = arith.constant 44 : index
    %208 = memref.load %arg2[%c44] : memref<65xf32, #tpu.memory_space<smem>>
    %209 = vector.broadcast %208 : f32 to vector<1x128xf32>
    %210 = arith.addf %207, %209 : vector<1x128xf32>
    %cst_16 = arith.constant 0.000000e+00 : f32
    %211 = vector.broadcast %cst_16 : f32 to vector<1x128xf32>
    %212 = arith.maximumf %210, %211 : vector<1x128xf32>
    %c60 = arith.constant 60 : index
    %213 = memref.load %arg2[%c60] : memref<65xf32, #tpu.memory_space<smem>>
    %214 = vector.broadcast %213 : f32 to vector<1x128xf32>
    %215 = arith.mulf %212, %214 : vector<1x128xf32>
    %216 = arith.addf %200, %215 : vector<1x128xf32>
    %c26 = arith.constant 26 : index
    %217 = memref.load %arg2[%c26] : memref<65xf32, #tpu.memory_space<smem>>
    %218 = vector.broadcast %217 : f32 to vector<1x128xf32>
    %219 = arith.mulf %4, %218 : vector<1x128xf32>
    %c27 = arith.constant 27 : index
    %220 = memref.load %arg2[%c27] : memref<65xf32, #tpu.memory_space<smem>>
    %221 = vector.broadcast %220 : f32 to vector<1x128xf32>
    %222 = arith.mulf %7, %221 : vector<1x128xf32>
    %223 = arith.addf %219, %222 : vector<1x128xf32>
    %c45 = arith.constant 45 : index
    %224 = memref.load %arg2[%c45] : memref<65xf32, #tpu.memory_space<smem>>
    %225 = vector.broadcast %224 : f32 to vector<1x128xf32>
    %226 = arith.addf %223, %225 : vector<1x128xf32>
    %cst_17 = arith.constant 0.000000e+00 : f32
    %227 = vector.broadcast %cst_17 : f32 to vector<1x128xf32>
    %228 = arith.maximumf %226, %227 : vector<1x128xf32>
    %c61 = arith.constant 61 : index
    %229 = memref.load %arg2[%c61] : memref<65xf32, #tpu.memory_space<smem>>
    %230 = vector.broadcast %229 : f32 to vector<1x128xf32>
    %231 = arith.mulf %228, %230 : vector<1x128xf32>
    %232 = arith.addf %216, %231 : vector<1x128xf32>
    %c28 = arith.constant 28 : index
    %233 = memref.load %arg2[%c28] : memref<65xf32, #tpu.memory_space<smem>>
    %234 = vector.broadcast %233 : f32 to vector<1x128xf32>
    %235 = arith.mulf %4, %234 : vector<1x128xf32>
    %c29 = arith.constant 29 : index
    %236 = memref.load %arg2[%c29] : memref<65xf32, #tpu.memory_space<smem>>
    %237 = vector.broadcast %236 : f32 to vector<1x128xf32>
    %238 = arith.mulf %7, %237 : vector<1x128xf32>
    %239 = arith.addf %235, %238 : vector<1x128xf32>
    %c46 = arith.constant 46 : index
    %240 = memref.load %arg2[%c46] : memref<65xf32, #tpu.memory_space<smem>>
    %241 = vector.broadcast %240 : f32 to vector<1x128xf32>
    %242 = arith.addf %239, %241 : vector<1x128xf32>
    %cst_18 = arith.constant 0.000000e+00 : f32
    %243 = vector.broadcast %cst_18 : f32 to vector<1x128xf32>
    %244 = arith.maximumf %242, %243 : vector<1x128xf32>
    %c62 = arith.constant 62 : index
    %245 = memref.load %arg2[%c62] : memref<65xf32, #tpu.memory_space<smem>>
    %246 = vector.broadcast %245 : f32 to vector<1x128xf32>
    %247 = arith.mulf %244, %246 : vector<1x128xf32>
    %248 = arith.addf %232, %247 : vector<1x128xf32>
    %c30 = arith.constant 30 : index
    %249 = memref.load %arg2[%c30] : memref<65xf32, #tpu.memory_space<smem>>
    %250 = vector.broadcast %249 : f32 to vector<1x128xf32>
    %251 = arith.mulf %4, %250 : vector<1x128xf32>
    %c31 = arith.constant 31 : index
    %252 = memref.load %arg2[%c31] : memref<65xf32, #tpu.memory_space<smem>>
    %253 = vector.broadcast %252 : f32 to vector<1x128xf32>
    %254 = arith.mulf %7, %253 : vector<1x128xf32>
    %255 = arith.addf %251, %254 : vector<1x128xf32>
    %c47 = arith.constant 47 : index
    %256 = memref.load %arg2[%c47] : memref<65xf32, #tpu.memory_space<smem>>
    %257 = vector.broadcast %256 : f32 to vector<1x128xf32>
    %258 = arith.addf %255, %257 : vector<1x128xf32>
    %cst_19 = arith.constant 0.000000e+00 : f32
    %259 = vector.broadcast %cst_19 : f32 to vector<1x128xf32>
    %260 = arith.maximumf %258, %259 : vector<1x128xf32>
    %c63 = arith.constant 63 : index
    %261 = memref.load %arg2[%c63] : memref<65xf32, #tpu.memory_space<smem>>
    %262 = vector.broadcast %261 : f32 to vector<1x128xf32>
    %263 = arith.mulf %260, %262 : vector<1x128xf32>
    %264 = arith.addf %248, %263 : vector<1x128xf32>
    %c64 = arith.constant 64 : index
    %265 = memref.load %arg2[%c64] : memref<65xf32, #tpu.memory_space<smem>>
    %266 = vector.broadcast %265 : f32 to vector<1x128xf32>
    %267 = arith.addf %264, %266 : vector<1x128xf32>
    %cst_20 = arith.constant 0.000000e+00 : f32
    %268 = vector.broadcast %cst_20 : f32 to vector<1x128xf32>
    %269 = arith.subf %268, %267 : vector<1x128xf32>
    %270 = math.exp %269 : vector<1x128xf32>
    %cst_21 = arith.constant 1.000000e+00 : f32
    %271 = vector.broadcast %cst_21 : f32 to vector<1x128xf32>
    %272 = arith.addf %271, %270 : vector<1x128xf32>
    %cst_22 = arith.constant 1.000000e+00 : f32
    %273 = vector.broadcast %cst_22 : f32 to vector<1x128xf32>
    %274 = arith.divf %273, %272 : vector<1x128xf32>
    %275 = arith.index_cast %1 : i32 to index
    %c0_23 = arith.constant 0 : index
    %276 = vector.load %arg3[%275, %c0_23] : memref<1x128xf32, #tpu.memory_space<vmem>>, vector<1x128xf32>
    tpu.vector_store %arg3[%275, %c0_23], %274 {strides = array<i32>} : memref<1x128xf32, #tpu.memory_space<vmem>>, vector<1x128xf32>,
    %c1_i32_24 = arith.constant 1 : i32
    return
  }
  func.func @transform_0(%arg0: i32) -> (i32, i32, i32) {
    %c0_i32 = arith.constant 0 : i32
    %c0_i32_0 = arith.constant 0 : i32
    %c0_i32_1 = arith.constant 0 : i32
    return %c0_i32, %arg0, %c0_i32_0 : i32, i32, i32
  }
  func.func @transform_1(%arg0: i32) -> i32 {
    %c0_i32 = arith.constant 0 : i32
    %c0_i32_0 = arith.constant 0 : i32
    return %c0_i32 : i32
  }
  func.func @transform_2(%arg0: i32) -> (i32, i32) {
    %c0_i32 = arith.constant 0 : i32
    %c0_i32_0 = arith.constant 0 : i32
    return %arg0, %c0_i32 : i32, i32
  }
}

</mosaic_0001>

<llo_original>
// kernel: tpu_custom_call.1
$region0: #{tpu_custom_call.1}
  #allocation0 [shape = 'u32[]', space=smem, size = 0x4, offset = 0x4, fixed_abs, tag = 'smem constant byte address 0x4 - core index']
  #allocation1 [shape = 'u32[144,128]{1,0:T(1,128)}', space=vmem, size = 0x12000, scoped, tag = 'internal scratch']
  %s0 = inlined_call_operand.hbm [shape: f32[2,1,128], index: 0, kind: input, shape index: {}]
  %s1 = inlined_call_operand.vmem [shape: f32[65], index: 1, kind: input, shape index: {}]
  %s2 = inlined_call_operand.hbm [shape: f32[1,128], index: 2, kind: output, shape index: {}]
  %s3 = sld [smem:[#allocation0]]
  $region26: #{tpu_custom_call.1} parent=0
    _
  %s5 = ssub.s32 1, %s3
  %s6 = scalar_select 0, %s5, %s3
  $region1: #{tpu_custom_call.1} parent=0
    #allocation2 [shape = 'u8[1024]{0}', space=vmem, size = 0x400, scoped, tag = 'input window, operand 0, single buffered']
    #allocation3 [shape = 's32[1]{0}', space=sflag, size = 0x4, scoped, tag = 'scoped memory for tpu_custom_call.1']
    #allocation4 [shape = 's32[1]{0}', space=sflag, size = 0x4, scoped, tag = 'scoped memory for tpu_custom_call.1']
    #allocation5 [shape = 's32[1]{0}', space=sflag, size = 0x4, scoped, tag = 'scoped memory for tpu_custom_call.1']
    #allocation6 [shape = 'u8[512]{0}', space=smem, size = 0x200, scoped, tag = 'input window, operand 1, single buffered']
    #allocation7 [shape = 'u8[512]{0}', space=vmem, size = 0x400, scoped, tag = 'output window, operand 0, single buffered']
    %7 = vsyncpa [#allocation3], 0
    %8 = vsyncpa [#allocation5], 0
    %9 = vsyncpa [#allocation4], 0
    // Predicated region
    $region2: #{tpu_custom_call.1} parent=1 // pred_check
      _
    $region3: #{tpu_custom_call.1} parent=1 // pred_check_branch
      %11 = sbr.rel (0) target = $region5
    $region4: #{tpu_custom_call.1} parent=1 // pred_region
      %s13 = ssub.s32 32, 32
      %14 = vsyncadd [#allocation3], %s13
      %s15 = sshll.u32 [#allocation2], 4
      %s16 = int_to_ptr.vmem [resolvable:$true] %s15
      %21 = dma.hbm_to_vmem [thread:$0]  %s0, 32, %s16, [#allocation3], 16, 16, 1
    $region5: #{tpu_custom_call.1} parent=1 // pred_fallthru
      _
    // Predicated region
    $region6: #{tpu_custom_call.1} parent=1 // pred_check
      _
    $region7: #{tpu_custom_call.1} parent=1 // pred_check_branch
      %23 = sbr.rel (0) target = $region9
    $region8: #{tpu_custom_call.1} parent=1 // pred_region
      %s25 = ssub.s32 16, 16
      %26 = vsyncadd [#allocation5], %s25
      %s28 = sshll.u32 %s1, 4
      %s29 = int_to_ptr.vmem [resolvable:$true] %s28
      %31 = dma.vmem_to_smem %s29, 16, [#allocation6], [#allocation5]
    $region9: #{tpu_custom_call.1} parent=1 // pred_fallthru
      _
    // Predicated region
    $region10: #{tpu_custom_call.1} parent=1 // pred_check
      _
    $region11: #{tpu_custom_call.1} parent=1 // pred_check_branch
      %33 = sbr.rel (0) target = $region13
    $region12: #{tpu_custom_call.1} parent=1 // pred_region
      %34 = dma.done [#allocation3], 32
    $region13: #{tpu_custom_call.1} parent=1 // pred_fallthru
      _
    // Predicated region
    $region14: #{tpu_custom_call.1} parent=1 // pred_check
      _
    $region15: #{tpu_custom_call.1} parent=1 // pred_check_branch
      %36 = sbr.rel (0) target = $region17
    $region16: #{tpu_custom_call.1} parent=1 // pred_region
      %37 = dma.done [#allocation5], 16
    $region17: #{tpu_custom_call.1} parent=1 // pred_fallthru
      _
    %38 = sfence
    %v39 = vld [vmem:[#allocation2] sm:$0x1]
    %s40 = sadd.s32 0, 1
    %s41 = scalar_lea.vmem [#allocation2], %s40
    %v42 = vld [vmem:[%s41] sm:$0x1]
    %s43 = sld [smem:[#allocation6]]
    %v44 = vstv %s43
    %v45 = vmul.f32 %v39, %v44
    %s46 = sld [smem:[#allocation6 + $0x1]]
    %v47 = vstv %s46
    %v48 = vmul.f32 %v42, %v47
    %v49 = vadd.f32 %v45, %v48
    %s50 = sld [smem:[#allocation6 + $0x20]]
    %v51 = vstv %s50
    %v52 = vadd.f32 %v49, %v51
    %v53 = vmax.f32 %v52, 0.0
    %s54 = sld [smem:[#allocation6 + $0x30]]
    %v55 = vstv %s54
    %v56 = vmul.f32 %v53, %v55
    %v57 = vadd.f32 %v56, 0.0
    %s58 = sld [smem:[#allocation6 + $0x2]]
    %v59 = vstv %s58
    %v60 = vmul.f32 %v39, %v59
    %s61 = sld [smem:[#allocation6 + $0x3]]
    %v62 = vstv %s61
    %v63 = vmul.f32 %v42, %v62
    %v64 = vadd.f32 %v60, %v63
    %s65 = sld [smem:[#allocation6 + $0x21]]
    %v66 = vstv %s65
    %v67 = vadd.f32 %v64, %v66
    %v68 = vmax.f32 %v67, 0.0
    %s69 = sld [smem:[#allocation6 + $0x31]]
    %v70 = vstv %s69
    %v71 = vmul.f32 %v68, %v70
    %v72 = vadd.f32 %v57, %v71
    %s73 = sld [smem:[#allocation6 + $0x4]]
    %v74 = vstv %s73
    %v75 = vmul.f32 %v39, %v74
    %s76 = sld [smem:[#allocation6 + $0x5]]
    %v77 = vstv %s76
    %v78 = vmul.f32 %v42, %v77
    %v79 = vadd.f32 %v75, %v78
    %s80 = sld [smem:[#allocation6 + $0x22]]
    %v81 = vstv %s80
    %v82 = vadd.f32 %v79, %v81
    %v83 = vmax.f32 %v82, 0.0
    %s84 = sld [smem:[#allocation6 + $0x32]]
    %v85 = vstv %s84
    %v86 = vmul.f32 %v83, %v85
    %v87 = vadd.f32 %v72, %v86
    %s88 = sld [smem:[#allocation6 + $0x6]]
    %v89 = vstv %s88
    %v90 = vmul.f32 %v39, %v89
    %s91 = sld [smem:[#allocation6 + $0x7]]
    %v92 = vstv %s91
    %v93 = vmul.f32 %v42, %v92
    %v94 = vadd.f32 %v90, %v93
    %s95 = sld [smem:[#allocation6 + $0x23]]
    %v96 = vstv %s95
    %v97 = vadd.f32 %v94, %v96
    %v98 = vmax.f32 %v97, 0.0
    %s99 = sld [smem:[#allocation6 + $0x33]]
    %v100 = vstv %s99
    %v101 = vmul.f32 %v98, %v100
    %v102 = vadd.f32 %v87, %v101
    %s103 = sld [smem:[#allocation6 + $0x8]]
    %v104 = vstv %s103
    %v105 = vmul.f32 %v39, %v104
    %s106 = sld [smem:[#allocation6 + $0x9]]
    %v107 = vstv %s106
    %v108 = vmul.f32 %v42, %v107
    %v109 = vadd.f32 %v105, %v108
    %s110 = sld [smem:[#allocation6 + $0x24]]
    %v111 = vstv %s110
    %v112 = vadd.f32 %v109, %v111
    %v113 = vmax.f32 %v112, 0.0
    %s114 = sld [smem:[#allocation6 + $0x34]]
    %v115 = vstv %s114
    %v116 = vmul.f32 %v113, %v115
    %v117 = vadd.f32 %v102, %v116
    %s118 = sld [smem:[#allocation6 + $0xa]]
    %v119 = vstv %s118
    %v120 = vmul.f32 %v39, %v119
    %s121 = sld [smem:[#allocation6 + $0xb]]
    %v122 = vstv %s121
    %v123 = vmul.f32 %v42, %v122
    %v124 = vadd.f32 %v120, %v123
    %s125 = sld [smem:[#allocation6 + $0x25]]
    %v126 = vstv %s125
    %v127 = vadd.f32 %v124, %v126
    %v128 = vmax.f32 %v127, 0.0
    %s129 = sld [smem:[#allocation6 + $0x35]]
    %v130 = vstv %s129
    %v131 = vmul.f32 %v128, %v130
    %v132 = vadd.f32 %v117, %v131
    %s133 = sld [smem:[#allocation6 + $0xc]]
    %v134 = vstv %s133
    %v135 = vmul.f32 %v39, %v134
    %s136 = sld [smem:[#allocation6 + $0xd]]
    %v137 = vstv %s136
    %v138 = vmul.f32 %v42, %v137
    %v139 = vadd.f32 %v135, %v138
    %s140 = sld [smem:[#allocation6 + $0x26]]
    %v141 = vstv %s140
    %v142 = vadd.f32 %v139, %v141
    %v143 = vmax.f32 %v142, 0.0
    %s144 = sld [smem:[#allocation6 + $0x36]]
    %v145 = vstv %s144
    %v146 = vmul.f32 %v143, %v145
    %v147 = vadd.f32 %v132, %v146
    %s148 = sld [smem:[#allocation6 + $0xe]]
    %v149 = vstv %s148
    %v150 = vmul.f32 %v39, %v149
    %s151 = sld [smem:[#allocation6 + $0xf]]
    %v152 = vstv %s151
    %v153 = vmul.f32 %v42, %v152
    %v154 = vadd.f32 %v150, %v153
    %s155 = sld [smem:[#allocation6 + $0x27]]
    %v156 = vstv %s155
    %v157 = vadd.f32 %v154, %v156
    %v158 = vmax.f32 %v157, 0.0
    %s159 = sld [smem:[#allocation6 + $0x37]]
    %v160 = vstv %s159
    %v161 = vmul.f32 %v158, %v160
    %v162 = vadd.f32 %v147, %v161
    %s163 = sld [smem:[#allocation6 + $0x10]]
    %v164 = vstv %s163
    %v165 = vmul.f32 %v39, %v164
    %s166 = sld [smem:[#allocation6 + $0x11]]
    %v167 = vstv %s166
    %v168 = vmul.f32 %v42, %v167
    %v169 = vadd.f32 %v165, %v168
    %s170 = sld [smem:[#allocation6 + $0x28]]
    %v171 = vstv %s170
    %v172 = vadd.f32 %v169, %v171
    %v173 = vmax.f32 %v172, 0.0
    %s174 = sld [smem:[#allocation6 + $0x38]]
    %v175 = vstv %s174
    %v176 = vmul.f32 %v173, %v175
    %v177 = vadd.f32 %v162, %v176
    %s178 = sld [smem:[#allocation6 + $0x12]]
    %v179 = vstv %s178
    %v180 = vmul.f32 %v39, %v179
    %s181 = sld [smem:[#allocation6 + $0x13]]
    %v182 = vstv %s181
    %v183 = vmul.f32 %v42, %v182
    %v184 = vadd.f32 %v180, %v183
    %s185 = sld [smem:[#allocation6 + $0x29]]
    %v186 = vstv %s185
    %v187 = vadd.f32 %v184, %v186
    %v188 = vmax.f32 %v187, 0.0
    %s189 = sld [smem:[#allocation6 + $0x39]]
    %v190 = vstv %s189
    %v191 = vmul.f32 %v188, %v190
    %v192 = vadd.f32 %v177, %v191
    %s193 = sld [smem:[#allocation6 + $0x14]]
    %v194 = vstv %s193
    %v195 = vmul.f32 %v39, %v194
    %s196 = sld [smem:[#allocation6 + $0x15]]
    %v197 = vstv %s196
    %v198 = vmul.f32 %v42, %v197
    %v199 = vadd.f32 %v195, %v198
    %s200 = sld [smem:[#allocation6 + $0x2a]]
    %v201 = vstv %s200
    %v202 = vadd.f32 %v199, %v201
    %v203 = vmax.f32 %v202, 0.0
    %s204 = sld [smem:[#allocation6 + $0x3a]]
    %v205 = vstv %s204
    %v206 = vmul.f32 %v203, %v205
    %v207 = vadd.f32 %v192, %v206
    %s208 = sld [smem:[#allocation6 + $0x16]]
    %v209 = vstv %s208
    %v210 = vmul.f32 %v39, %v209
    %s211 = sld [smem:[#allocation6 + $0x17]]
    %v212 = vstv %s211
    %v213 = vmul.f32 %v42, %v212
    %v214 = vadd.f32 %v210, %v213
    %s215 = sld [smem:[#allocation6 + $0x2b]]
    %v216 = vstv %s215
    %v217 = vadd.f32 %v214, %v216
    %v218 = vmax.f32 %v217, 0.0
    %s219 = sld [smem:[#allocation6 + $0x3b]]
    %v220 = vstv %s219
    %v221 = vmul.f32 %v218, %v220
    %v222 = vadd.f32 %v207, %v221
    %s223 = sld [smem:[#allocation6 + $0x18]]
    %v224 = vstv %s223
    %v225 = vmul.f32 %v39, %v224
    %s226 = sld [smem:[#allocation6 + $0x19]]
    %v227 = vstv %s226
    %v228 = vmul.f32 %v42, %v227
    %v229 = vadd.f32 %v225, %v228
    %s230 = sld [smem:[#allocation6 + $0x2c]]
    %v231 = vstv %s230
    %v232 = vadd.f32 %v229, %v231
    %v233 = vmax.f32 %v232, 0.0
    %s234 = sld [smem:[#allocation6 + $0x3c]]
    %v235 = vstv %s234
    %v236 = vmul.f32 %v233, %v235
    %v237 = vadd.f32 %v222, %v236
    %s238 = sld [smem:[#allocation6 + $0x1a]]
    %v239 = vstv %s238
    %v240 = vmul.f32 %v39, %v239
    %s241 = sld [smem:[#allocation6 + $0x1b]]
    %v242 = vstv %s241
    %v243 = vmul.f32 %v42, %v242
    %v244 = vadd.f32 %v240, %v243
    %s245 = sld [smem:[#allocation6 + $0x2d]]
    %v246 = vstv %s245
    %v247 = vadd.f32 %v244, %v246
    %v248 = vmax.f32 %v247, 0.0
    %s249 = sld [smem:[#allocation6 + $0x3d]]
    %v250 = vstv %s249
    %v251 = vmul.f32 %v248, %v250
    %v252 = vadd.f32 %v237, %v251
    %s253 = sld [smem:[#allocation6 + $0x1c]]
    %v254 = vstv %s253
    %v255 = vmul.f32 %v39, %v254
    %s256 = sld [smem:[#allocation6 + $0x1d]]
    %v257 = vstv %s256
    %v258 = vmul.f32 %v42, %v257
    %v259 = vadd.f32 %v255, %v258
    %s260 = sld [smem:[#allocation6 + $0x2e]]
    %v261 = vstv %s260
    %v262 = vadd.f32 %v259, %v261
    %v263 = vmax.f32 %v262, 0.0
    %s264 = sld [smem:[#allocation6 + $0x3e]]
    %v265 = vstv %s264
    %v266 = vmul.f32 %v263, %v265
    %v267 = vadd.f32 %v252, %v266
    %s268 = sld [smem:[#allocation6 + $0x1e]]
    %v269 = vstv %s268
    %v270 = vmul.f32 %v39, %v269
    %s271 = sld [smem:[#allocation6 + $0x1f]]
    %v272 = vstv %s271
    %v273 = vmul.f32 %v42, %v272
    %v274 = vadd.f32 %v270, %v273
    %s275 = sld [smem:[#allocation6 + $0x2f]]
    %v276 = vstv %s275
    %v277 = vadd.f32 %v274, %v276
    %v278 = vmax.f32 %v277, 0.0
    %s279 = sld [smem:[#allocation6 + $0x3f]]
    %v280 = vstv %s279
    %v281 = vmul.f32 %v278, %v280
    %v282 = vadd.f32 %v267, %v281
    %s283 = sld [smem:[#allocation6 + $0x40]]
    %v284 = vstv %s283
    %v285 = vadd.f32 %v282, %v284
    %v286 = vsub.f32 0.0, %v285
    %v287 = vmul.f32 %v286, 1.442695
    %v288 = vpow.pop %v287
    %v289 = vadd.f32 %v288, 1.0
    %v290 = vrcp.pop %v289
    %v291 = vmul.f32 1.0, %v290
    %292 = vst [vmem:[#allocation7] sm:$0x1] %v291
    // Predicated region
    $region18: #{tpu_custom_call.1} parent=1 // pred_check
      _
    $region19: #{tpu_custom_call.1} parent=1 // pred_check_branch
      %294 = sbr.rel (0) target = $region21
    $region20: #{tpu_custom_call.1} parent=1 // pred_region
      %s296 = ssub.s32 16, 16
      %297 = vsyncadd [#allocation4], %s296
      %s299 = sshll.u32 [#allocation7], 4
      %s300 = int_to_ptr.vmem [resolvable:$true] %s299
      %302 = dma.vmem_to_hbm [thread:$0]  %s300, 16, %s2, [#allocation4]
    $region21: #{tpu_custom_call.1} parent=1 // pred_fallthru
      _
    // Predicated region
    $region22: #{tpu_custom_call.1} parent=1 // pred_check
      _
    $region23: #{tpu_custom_call.1} parent=1 // pred_check_branch
      %304 = sbr.rel (0) target = $region25
    $region24: #{tpu_custom_call.1} parent=1 // pred_region
      %305 = dma.done [#allocation4], 16
    $region25: #{tpu_custom_call.1} parent=1 // pred_fallthru
      _
    %306 = vsyncpa [#allocation3], 1
    %307 = vsyncpa [#allocation4], 1
    %308 = vsyncpa [#allocation5], 1

</llo_original>
